<compile_context>
chip_gen: v6e
topology: v6e:2x2x1
jax: 0.10.0
libtpu: 0.0.40
codegen_flags: <defaults>
</compile_context>

<pallas_src>
import functools

import jax
import jax.numpy as jnp
from jax import lax
from jax.experimental import pallas as pl
from jax.experimental.pallas import tpu as pltpu

LN_EPS = 1e-5           # torch.nn.LayerNorm default eps
LANE = 128
SUBLANE_BF16 = 16       # bf16 packs 16 rows per sublane group


def _round_up(n, m):
    return ((n + m - 1) // m) * m


def _layernorm_noaffine(h, n_real):
    """LayerNorm over the first `n_real` lanes of f32 `h` (no affine; gamma/beta
    are folded into the next Linear).  Lanes >= n_real of `h` are exactly zero
    (zero-padded weight columns / bias lanes), so the full-width sum equals the
    real-lane sum.  Variance is two-pass with an explicit lane mask; the masked
    centering also re-zeroes the padded output lanes."""
    inv_n = 1.0 / float(n_real)
    mu = jnp.sum(h, axis=-1, keepdims=True) * inv_n
    lane = lax.broadcasted_iota(jnp.int32, h.shape, dimension=1)
    centered = jnp.where(lane < n_real, h - mu, 0.0)
    var = jnp.sum(centered * centered, axis=-1, keepdims=True) * inv_n
    return centered * lax.rsqrt(var + LN_EPS)


def predictor_kernel(nf_ref,
                     wg_ref, bg_ref,
                     w0_ref, b0_ref,
                     w1_ref, b1_ref,
                     w2_ref, b2_ref,
                     o_ref, *, hidden):
    # ---- graph_stack stand-in: Linear + tanh (tanh lands on the EUP slot) ----
    # TODO(synk): graph_stack is an opaque torch.nn.Module GNN; only its
    # output_dim contract is modeled (fused linear + tanh stand-in).
    x = jnp.tanh(jnp.dot(nf_ref[...], wg_ref[...],
                         preferred_element_type=jnp.float32) + bg_ref[...])

    # ---- layer 0: Linear -> LayerNorm -> Dropout (identity @ eval) ----
    h = jnp.dot(x.astype(jnp.bfloat16), w0_ref[...],
                preferred_element_type=jnp.float32) + b0_ref[...]
    h = _layernorm_noaffine(h, hidden)

    # ---- layer 1: Linear (LN0 affine pre-folded) -> LayerNorm -> Dropout ----
    h = jnp.dot(h.astype(jnp.bfloat16), w1_ref[...],
                preferred_element_type=jnp.float32) + b1_ref[...]
    h = _layernorm_noaffine(h, hidden)

    # ---- final layer: Linear(H -> output_channels), LN1 affine pre-folded ----
    o_ref[...] = (jnp.dot(h.astype(jnp.bfloat16), w2_ref[...],
                          preferred_element_type=jnp.float32)
                  + b2_ref[...]).astype(o_ref.dtype)


def _fold_layernorm_affine(params):
    """Fold LayerNorm gamma/beta into the downstream Linear (f32, unpadded)."""
    g0, be0 = params["g0"], params["be0"]
    g1, be1 = params["g1"], params["be1"]
    w1f = g0.reshape(-1, 1) * params["w1"]          # diag(g0) @ w1
    b1f = params["b1"] + be0 @ params["w1"]
    w2f = g1.reshape(-1, 1) * params["w2"]          # diag(g1) @ w2
    b2f = params["b2"] + be1 @ params["w2"]
    return w1f, b1f, w2f, b2f


def prepare_params(params):
    """One-time prep: fold LN affine, zero-pad to 128 lanes, weights -> bf16."""
    fin, hidden = params["w0"].shape
    dout = params["w2"].shape[1]
    fp, hp, dp = _round_up(fin, LANE), _round_up(hidden, LANE), _round_up(dout, LANE)

    w1f, b1f, w2f, b2f = _fold_layernorm_affine(params)

    def pad2(a, r, c, dtype=None):
        out = jnp.zeros((r, c), a.dtype).at[:a.shape[0], :a.shape[1]].set(a)
        return out.astype(dtype) if dtype is not None else out

    p = {
        # graph_stack stand-in
        "wg": pad2(params["wg"], fin, fp, jnp.bfloat16),
        "bg": pad2(params["bg"], 1, fp),
        # layer 0
        "w0": pad2(params["w0"], fp, hp, jnp.bfloat16),
        "b0": pad2(params["b0"], 1, hp),
        # layer 1 (LN0 affine folded)
        "w1": pad2(w1f, hp, hp, jnp.bfloat16),
        "b1": pad2(b1f, 1, hp),
        # final layer (LN1 affine folded)
        "w2": pad2(w2f, hp, dp, jnp.bfloat16),
        "b2": pad2(b2f, 1, dp),
    }
    return p, (fin, hidden, dout, fp, hp, dp)


def _choose_tile_m(n_rows, *, min_steps=2, cap=2048):
    """>=2 grid steps when rows allow (both v7x TCs get work via "parallel");
    large tiles up to `cap` amortize per-step overhead on v5e/v6e; minimum 16
    rows for clean bf16 packing.  Row padding is at most one tile."""
    tm = _round_up(pl.cdiv(n_rows, min_steps), SUBLANE_BF16)
    return max(SUBLANE_BF16, min(tm, cap))


def make_predictor(params, *, out_dtype=jnp.float32):
    """Prepare (pad/fold/cast) params ONCE and return a jitted forward fn."""
    p, (fin, hidden, dout, fp, hp, dp) = prepare_params(params)
    kernel = functools.partial(predictor_kernel, hidden=hidden)

    @jax.jit
    def forward(node_feats):
        N, f = node_feats.shape
        assert f == fin, f"expected {fin} input features, got {f}"

        tile_m = _choose_tile_m(N)
        n_pad = _round_up(N, tile_m)

        # bf16 cast fused with the (at most one-tile) row pad under this jit:
        # input is touched once and the kernel's input DMA bytes are halved.
        x = node_feats.astype(jnp.bfloat16)
        if n_pad != N:
            x = jnp.pad(x, ((0, n_pad - N), (0, 0)))

        grid = (n_pad // tile_m,)
        const = functools.partial(pl.BlockSpec, index_map=lambda i: (0, 0))

        out = pl.pallas_call(
            kernel,
            # bf16 lane-dense padded output: halves the dominant HBM writeback.
            out_shape=jax.ShapeDtypeStruct((n_pad, dp), jnp.bfloat16),
            grid_spec=pltpu.PrefetchScalarGridSpec(
                num_scalar_prefetch=0,
                grid=grid,
                in_specs=[
                    pl.BlockSpec((tile_m, fin), lambda i: (i, 0)),   # node rows
                    const((fin, fp)), const((1, fp)),                # graph stand-in
                    const((fp, hp)), const((1, hp)),                 # layer 0
                    const((hp, hp)), const((1, hp)),                 # layer 1 (folded)
                    const((hp, dp)), const((1, dp)),                 # final (folded)
                ],
                out_specs=pl.BlockSpec((tile_m, dp), lambda i: (i, 0)),
            ),
            compiler_params=pltpu.CompilerParams(
                dimension_semantics=("parallel",)),
        )(x, p["wg"], p["bg"], p["w0"], p["b0"],
          p["w1"], p["b1"], p["w2"], p["b2"])

        # Slice + upcast fuse with the kernel output under this jit; the padded
        # lanes are never re-read into a materialized f32 array.
        return out[:N, :dout].astype(out_dtype)

    return forward


def make_params(key, graph_output_dim, hidden, output_channels):
    """Deterministic synthetic parameters for a pred_layers=3 head + graph stand-in.
    Gamma/beta are non-trivial so the affine-folding path is actually exercised."""
    ks = jax.random.split(key, 12)
    return {
        "w0": jax.random.normal(ks[0], (graph_output_dim, hidden), jnp.float32) * 0.1,
        "b0": jax.random.normal(ks[1], (1, hidden), jnp.float32) * 0.01,
        "g0": 1.0 + 0.1 * jax.random.normal(ks[2], (1, hidden), jnp.float32),
        "be0": 0.05 * jax.random.normal(ks[3], (1, hidden), jnp.float32),
        "w1": jax.random.normal(ks[4], (hidden, hidden), jnp.float32) * 0.1,
        "b1": jax.random.normal(ks[5], (1, hidden), jnp.float32) * 0.01,
        "g1": 1.0 + 0.1 * jax.random.normal(ks[6], (1, hidden), jnp.float32),
        "be1": 0.05 * jax.random.normal(ks[7], (1, hidden), jnp.float32),
        "w2": jax.random.normal(ks[8], (hidden, output_channels), jnp.float32) * 0.1,
        "b2": jax.random.normal(ks[9], (1, output_channels), jnp.float32) * 0.01,
        # stand-in "graph_stack" linear
        "wg": jax.random.normal(ks[10], (graph_output_dim, graph_output_dim), jnp.float32) * 0.1,
        "bg": jax.random.normal(ks[11], (1, graph_output_dim), jnp.float32) * 0.01,
    }


def reference_forward(node_feats, params):
    """Pure-JAX f32 reference matching the PyTorch module semantics (eval mode)."""
    def ln(h, g, b):
        mu = jnp.mean(h, axis=-1, keepdims=True)
        var = jnp.mean((h - mu) ** 2, axis=-1, keepdims=True)
        return (h - mu) * lax.rsqrt(var + LN_EPS) * g + b

    x = jnp.tanh(node_feats @ params["wg"] + params["bg"])
    h = ln(x @ params["w0"] + params["b0"], params["g0"], params["be0"])
    h = ln(h @ params["w1"] + params["b1"], params["g1"], params["be1"])
    return h @ params["w2"] + params["b2"]


if __name__ == "__main__":
    key = jax.random.PRNGKey(0)
    N = 16                      # number of graph nodes
    GRAPH_OUT_DIM = 32          # graph_model.output_dim
    HIDDEN = 64                 # pred_hidden_channels
    OUT = 5                     # output_channels

    k_in, k_p = jax.random.split(key)
    node_feats = jax.random.normal(k_in, (N, GRAPH_OUT_DIM), jnp.float32)
    params = make_params(k_p, GRAPH_OUT_DIM, HIDDEN, OUT)

    forward = make_predictor(params)       # one-time param prep (hoisted)
    out = jax.block_until_ready(forward(node_feats))

    ref = reference_forward(node_feats, params)
    assert out.shape == (N, OUT)
    # bf16 MXU matmuls (f32 acc) + bf16 output writeback vs pure-f32 reference.
    err = float(jnp.max(jnp.abs(out - ref)))
    assert jnp.allclose(out, ref, atol=5e-2, rtol=5e-2), f"max abs err={err}"

    print("KERNEL_OK")
</pallas_src>

<mosaic_0001>
module attributes {stable_mosaic.version = 11 : i64} {
  func.func @predictor_kernel(%arg0: i32, %arg1: memref<16x32xbf16, #tpu.memory_space<vmem>>, %arg2: memref<32x128xbf16, #tpu.memory_space<vmem>>, %arg3: memref<1x128xf32, #tpu.memory_space<vmem>>, %arg4: memref<128x128xbf16, #tpu.memory_space<vmem>>, %arg5: memref<1x128xf32, #tpu.memory_space<vmem>>, %arg6: memref<128x128xbf16, #tpu.memory_space<vmem>>, %arg7: memref<1x128xf32, #tpu.memory_space<vmem>>, %arg8: memref<128x128xbf16, #tpu.memory_space<vmem>>, %arg9: memref<1x128xf32, #tpu.memory_space<vmem>>, %arg10: memref<16x128xbf16, #tpu.memory_space<vmem>>) attributes {dimension_semantics = [#tpu.dimension_semantics<parallel>], iteration_bounds = array<i64: 1>, scalar_prefetch = 0 : i64, scratch_operands = 0 : i64, tpu.core_type = #tpu.core_type<tc>, window_params = [{transform_indices = @transform_0, window_bounds = array<i64: 16, 32>}, {pipeline_mode = #tpu.pipeline_mode<synchronous>, transform_indices = @transform_1, window_bounds = array<i64: 32, 128>}, {pipeline_mode = #tpu.pipeline_mode<synchronous>, transform_indices = @transform_2, window_bounds = array<i64: 1, 128>}, {pipeline_mode = #tpu.pipeline_mode<synchronous>, transform_indices = @transform_3, window_bounds = array<i64: 128, 128>}, {pipeline_mode = #tpu.pipeline_mode<synchronous>, transform_indices = @transform_4, window_bounds = array<i64: 1, 128>}, {pipeline_mode = #tpu.pipeline_mode<synchronous>, transform_indices = @transform_5, window_bounds = array<i64: 128, 128>}, {pipeline_mode = #tpu.pipeline_mode<synchronous>, transform_indices = @transform_6, window_bounds = array<i64: 1, 128>}, {pipeline_mode = #tpu.pipeline_mode<synchronous>, transform_indices = @transform_7, window_bounds = array<i64: 128, 128>}, {pipeline_mode = #tpu.pipeline_mode<synchronous>, transform_indices = @transform_8, window_bounds = array<i64: 1, 128>}, {transform_indices = @transform_9, window_bounds = array<i64: 16, 128>}]} {
    %c0 = arith.constant 0 : index
    %c0_0 = arith.constant 0 : index
    %0 = vector.load %arg1[%c0, %c0_0] : memref<16x32xbf16, #tpu.memory_space<vmem>>, vector<16x32xbf16>
    %c0_1 = arith.constant 0 : index
    %c0_2 = arith.constant 0 : index
    %1 = vector.load %arg2[%c0_1, %c0_2] : memref<32x128xbf16, #tpu.memory_space<vmem>>, vector<32x128xbf16>
    %cst = arith.constant dense<0.000000e+00> : vector<16x128xf32>
    %2 = tpu.matmul %0, %1, %cst {dimension_numbers = #tpu.dot_dimension_numbers<[1], [0], [0], [1], [0, 0, 1, 1], [], []>} : vector<16x32xbf16>, vector<32x128xbf16>, vector<16x128xf32> -> vector<16x128xf32>
    %c0_3 = arith.constant 0 : index
    %c0_4 = arith.constant 0 : index
    %3 = vector.load %arg3[%c0_3, %c0_4] : memref<1x128xf32, #tpu.memory_space<vmem>>, vector<1x128xf32>
    %4 = vector.broadcast %3 : vector<1x128xf32> to vector<16x128xf32>
    %5 = arith.addf %2, %4 : vector<16x128xf32>
    %6 = math.tanh %5 : vector<16x128xf32>
    %7 = arith.truncf %6 : vector<16x128xf32> to vector<16x128xbf16>
    %c0_5 = arith.constant 0 : index
    %c0_6 = arith.constant 0 : index
    %8 = vector.load %arg4[%c0_5, %c0_6] : memref<128x128xbf16, #tpu.memory_space<vmem>>, vector<128x128xbf16>
    %cst_7 = arith.constant dense<0.000000e+00> : vector<16x128xf32>
    %9 = tpu.matmul %7, %8, %cst_7 {dimension_numbers = #tpu.dot_dimension_numbers<[1], [0], [0], [1], [0, 0, 1, 1], [], []>} : vector<16x128xbf16>, vector<128x128xbf16>, vector<16x128xf32> -> vector<16x128xf32>
    %c0_8 = arith.constant 0 : index
    %c0_9 = arith.constant 0 : index
    %10 = vector.load %arg5[%c0_8, %c0_9] : memref<1x128xf32, #tpu.memory_space<vmem>>, vector<1x128xf32>
    %11 = vector.broadcast %10 : vector<1x128xf32> to vector<16x128xf32>
    %12 = arith.addf %9, %11 : vector<16x128xf32>
    %cst_10 = arith.constant dense<0.000000e+00> : vector<16xf32>
    %13 = vector.multi_reduction <add>, %12, %cst_10 [1] : vector<16x128xf32> to vector<16xf32>
    %14 = vector.shape_cast %13 : vector<16xf32> to vector<16x1xf32>
    %cst_11 = arith.constant 1.562500e-02 : f32
    %15 = vector.broadcast %cst_11 : f32 to vector<16x1xf32>
    %16 = arith.mulf %14, %15 : vector<16x1xf32>
    %17 = tpu.iota {dimensions = array<i32: 1>} : vector<16x128xi32>
    %c64_i32 = arith.constant 64 : i32
    %18 = vector.broadcast %c64_i32 : i32 to vector<16x128xi32>
    %19 = arith.cmpi slt, %17, %18 : vector<16x128xi32>
    %20 = vector.broadcast %16 : vector<16x1xf32> to vector<16x128xf32>
    %21 = arith.subf %12, %20 : vector<16x128xf32>
    %cst_12 = arith.constant 0.000000e+00 : f32
    %22 = vector.broadcast %cst_12 : f32 to vector<16x128xf32>
    %23 = arith.select %19, %21, %22 : vector<16x128xi1>, vector<16x128xf32>
    %24 = arith.mulf %23, %23 : vector<16x128xf32>
    %cst_13 = arith.constant dense<0.000000e+00> : vector<16xf32>
    %25 = vector.multi_reduction <add>, %24, %cst_13 [1] : vector<16x128xf32> to vector<16xf32>
    %26 = vector.shape_cast %25 : vector<16xf32> to vector<16x1xf32>
    %cst_14 = arith.constant 1.562500e-02 : f32
    %27 = vector.broadcast %cst_14 : f32 to vector<16x1xf32>
    %28 = arith.mulf %26, %27 : vector<16x1xf32>
    %cst_15 = arith.constant 9.99999974E-6 : f32
    %29 = vector.broadcast %cst_15 : f32 to vector<16x1xf32>
    %30 = arith.addf %28, %29 : vector<16x1xf32>
    %31 = math.rsqrt %30 : vector<16x1xf32>
    %32 = vector.broadcast %31 : vector<16x1xf32> to vector<16x128xf32>
    %33 = arith.mulf %23, %32 : vector<16x128xf32>
    %34 = arith.truncf %33 : vector<16x128xf32> to vector<16x128xbf16>
    %c0_16 = arith.constant 0 : index
    %c0_17 = arith.constant 0 : index
    %35 = vector.load %arg6[%c0_16, %c0_17] : memref<128x128xbf16, #tpu.memory_space<vmem>>, vector<128x128xbf16>
    %cst_18 = arith.constant dense<0.000000e+00> : vector<16x128xf32>
    %36 = tpu.matmul %34, %35, %cst_18 {dimension_numbers = #tpu.dot_dimension_numbers<[1], [0], [0], [1], [0, 0, 1, 1], [], []>} : vector<16x128xbf16>, vector<128x128xbf16>, vector<16x128xf32> -> vector<16x128xf32>
    %c0_19 = arith.constant 0 : index
    %c0_20 = arith.constant 0 : index
    %37 = vector.load %arg7[%c0_19, %c0_20] : memref<1x128xf32, #tpu.memory_space<vmem>>, vector<1x128xf32>
    %38 = vector.broadcast %37 : vector<1x128xf32> to vector<16x128xf32>
    %39 = arith.addf %36, %38 : vector<16x128xf32>
    %cst_21 = arith.constant dense<0.000000e+00> : vector<16xf32>
    %40 = vector.multi_reduction <add>, %39, %cst_21 [1] : vector<16x128xf32> to vector<16xf32>
    %41 = vector.shape_cast %40 : vector<16xf32> to vector<16x1xf32>
    %cst_22 = arith.constant 1.562500e-02 : f32
    %42 = vector.broadcast %cst_22 : f32 to vector<16x1xf32>
    %43 = arith.mulf %41, %42 : vector<16x1xf32>
    %44 = tpu.iota {dimensions = array<i32: 1>} : vector<16x128xi32>
    %c64_i32_23 = arith.constant 64 : i32
    %45 = vector.broadcast %c64_i32_23 : i32 to vector<16x128xi32>
    %46 = arith.cmpi slt, %44, %45 : vector<16x128xi32>
    %47 = vector.broadcast %43 : vector<16x1xf32> to vector<16x128xf32>
    %48 = arith.subf %39, %47 : vector<16x128xf32>
    %cst_24 = arith.constant 0.000000e+00 : f32
    %49 = vector.broadcast %cst_24 : f32 to vector<16x128xf32>
    %50 = arith.select %46, %48, %49 : vector<16x128xi1>, vector<16x128xf32>
    %51 = arith.mulf %50, %50 : vector<16x128xf32>
    %cst_25 = arith.constant dense<0.000000e+00> : vector<16xf32>
    %52 = vector.multi_reduction <add>, %51, %cst_25 [1] : vector<16x128xf32> to vector<16xf32>
    %53 = vector.shape_cast %52 : vector<16xf32> to vector<16x1xf32>
    %cst_26 = arith.constant 1.562500e-02 : f32
    %54 = vector.broadcast %cst_26 : f32 to vector<16x1xf32>
    %55 = arith.mulf %53, %54 : vector<16x1xf32>
    %cst_27 = arith.constant 9.99999974E-6 : f32
    %56 = vector.broadcast %cst_27 : f32 to vector<16x1xf32>
    %57 = arith.addf %55, %56 : vector<16x1xf32>
    %58 = math.rsqrt %57 : vector<16x1xf32>
    %59 = vector.broadcast %58 : vector<16x1xf32> to vector<16x128xf32>
    %60 = arith.mulf %50, %59 : vector<16x128xf32>
    %61 = arith.truncf %60 : vector<16x128xf32> to vector<16x128xbf16>
    %c0_28 = arith.constant 0 : index
    %c0_29 = arith.constant 0 : index
    %62 = vector.load %arg8[%c0_28, %c0_29] : memref<128x128xbf16, #tpu.memory_space<vmem>>, vector<128x128xbf16>
    %cst_30 = arith.constant dense<0.000000e+00> : vector<16x128xf32>
    %63 = tpu.matmul %61, %62, %cst_30 {dimension_numbers = #tpu.dot_dimension_numbers<[1], [0], [0], [1], [0, 0, 1, 1], [], []>} : vector<16x128xbf16>, vector<128x128xbf16>, vector<16x128xf32> -> vector<16x128xf32>
    %c0_31 = arith.constant 0 : index
    %c0_32 = arith.constant 0 : index
    %64 = vector.load %arg9[%c0_31, %c0_32] : memref<1x128xf32, #tpu.memory_space<vmem>>, vector<1x128xf32>
    %65 = vector.broadcast %64 : vector<1x128xf32> to vector<16x128xf32>
    %66 = arith.addf %63, %65 : vector<16x128xf32>
    %67 = arith.truncf %66 : vector<16x128xf32> to vector<16x128xbf16>
    %c0_33 = arith.constant 0 : index
    %c0_34 = arith.constant 0 : index
    %68 = vector.load %arg10[%c0_33, %c0_34] : memref<16x128xbf16, #tpu.memory_space<vmem>>, vector<16x128xbf16>
    tpu.vector_store %arg10[%c0_33, %c0_34], %67 {strides = array<i32>} : memref<16x128xbf16, #tpu.memory_space<vmem>>, vector<16x128xbf16>,
    return
  }
  func.func @transform_0(%arg0: i32) -> (i32, i32) {
    %c0_i32 = arith.constant 0 : i32
    %c0_i32_0 = arith.constant 0 : i32
    return %arg0, %c0_i32 : i32, i32
  }
  func.func @transform_1(%arg0: i32) -> (i32, i32) {
    %c0_i32 = arith.constant 0 : i32
    %c0_i32_0 = arith.constant 0 : i32
    %c0_i32_1 = arith.constant 0 : i32
    return %c0_i32, %c0_i32_0 : i32, i32
  }
  func.func @transform_2(%arg0: i32) -> (i32, i32) {
    %c0_i32 = arith.constant 0 : i32
    %c0_i32_0 = arith.constant 0 : i32
    %c0_i32_1 = arith.constant 0 : i32
    return %c0_i32, %c0_i32_0 : i32, i32
  }
  func.func @transform_3(%arg0: i32) -> (i32, i32) {
    %c0_i32 = arith.constant 0 : i32
    %c0_i32_0 = arith.constant 0 : i32
    %c0_i32_1 = arith.constant 0 : i32
    return %c0_i32, %c0_i32_0 : i32, i32
  }
  func.func @transform_4(%arg0: i32) -> (i32, i32) {
    %c0_i32 = arith.constant 0 : i32
    %c0_i32_0 = arith.constant 0 : i32
    %c0_i32_1 = arith.constant 0 : i32
    return %c0_i32, %c0_i32_0 : i32, i32
  }
  func.func @transform_5(%arg0: i32) -> (i32, i32) {
    %c0_i32 = arith.constant 0 : i32
    %c0_i32_0 = arith.constant 0 : i32
    %c0_i32_1 = arith.constant 0 : i32
    return %c0_i32, %c0_i32_0 : i32, i32
  }
  func.func @transform_6(%arg0: i32) -> (i32, i32) {
    %c0_i32 = arith.constant 0 : i32
    %c0_i32_0 = arith.constant 0 : i32
    %c0_i32_1 = arith.constant 0 : i32
    return %c0_i32, %c0_i32_0 : i32, i32
  }
  func.func @transform_7(%arg0: i32) -> (i32, i32) {
    %c0_i32 = arith.constant 0 : i32
    %c0_i32_0 = arith.constant 0 : i32
    %c0_i32_1 = arith.constant 0 : i32
    return %c0_i32, %c0_i32_0 : i32, i32
  }
  func.func @transform_8(%arg0: i32) -> (i32, i32) {
    %c0_i32 = arith.constant 0 : i32
    %c0_i32_0 = arith.constant 0 : i32
    %c0_i32_1 = arith.constant 0 : i32
    return %c0_i32, %c0_i32_0 : i32, i32
  }
  func.func @transform_9(%arg0: i32) -> (i32, i32) {
    %c0_i32 = arith.constant 0 : i32
    %c0_i32_0 = arith.constant 0 : i32
    return %arg0, %c0_i32 : i32, i32
  }
}

</mosaic_0001>

<llo_original>
// kernel: forward.1
$region0: #{forward.1}
  #allocation0 [shape = 'u32[]', space=smem, size = 0x4, offset = 0x4, fixed_abs, tag = 'smem constant byte address 0x4 - core index']
  #allocation1 [shape = 'u32[144,128]{1,0:T(1,128)}', space=vmem, size = 0x12000, scoped, tag = 'internal scratch']
  %s0 = inlined_call_operand.vmem [shape: bf16[16,32], index: 0, kind: input, shape index: {}]
  %s1 = inlined_call_operand.vmem [shape: bf16[32,128], index: 1, kind: input, shape index: {}]
  %s2 = inlined_call_operand.vmem [shape: f32[1,128], index: 2, kind: input, shape index: {}]
  %s3 = inlined_call_operand.hbm [shape: bf16[128,128], index: 3, kind: input, shape index: {}]
  %s4 = inlined_call_operand.vmem [shape: f32[1,128], index: 4, kind: input, shape index: {}]
  %s5 = inlined_call_operand.hbm [shape: bf16[128,128], index: 5, kind: input, shape index: {}]
  %s6 = inlined_call_operand.vmem [shape: f32[1,128], index: 6, kind: input, shape index: {}]
  %s7 = inlined_call_operand.hbm [shape: bf16[128,128], index: 7, kind: input, shape index: {}]
  %s8 = inlined_call_operand.vmem [shape: f32[1,128], index: 8, kind: input, shape index: {}]
  %s9 = inlined_call_operand.vmem [shape: bf16[16,128], index: 9, kind: output, shape index: {}]
  %s10 = sld [smem:[#allocation0]]
  $region58: #{forward.1} parent=0
    _
  %s12 = ssub.s32 1, %s10
  %s13 = scalar_select 0, %s12, %s10
  $region1: #{forward.1} parent=0
    #allocation2 [shape = 'u8[32768]{0}', space=vmem, size = 0x8000, scoped, tag = 'input window, operand 3, single buffered']
    #allocation3 [shape = 's32[1]{0}', space=sflag, size = 0x4, scoped, tag = 'scoped memory for forward.1']
    #allocation4 [shape = 'u8[32768]{0}', space=vmem, size = 0x8000, scoped, tag = 'input window, operand 5, single buffered']
    #allocation5 [shape = 's32[1]{0}', space=sflag, size = 0x4, scoped, tag = 'scoped memory for forward.1']
    #allocation6 [shape = 'u8[32768]{0}', space=vmem, size = 0x8000, scoped, tag = 'input window, operand 7, single buffered']
    %14 = vsyncpa [#allocation3], 0
    %15 = vsyncpa [#allocation5], 0
    // Predicated region
    $region2: #{forward.1} parent=1 // pred_check
      _
    $region3: #{forward.1} parent=1 // pred_check_branch
      %17 = sbr.rel (0) target = $region5
    $region4: #{forward.1} parent=1 // pred_region
      _
    $region5: #{forward.1} parent=1 // pred_fallthru
      _
    // Predicated region
    $region6: #{forward.1} parent=1 // pred_check
      _
    $region7: #{forward.1} parent=1 // pred_check_branch
      %19 = sbr.rel (0) target = $region9
    $region8: #{forward.1} parent=1 // pred_region
      _
    $region9: #{forward.1} parent=1 // pred_fallthru
      _
    // Predicated region
    $region10: #{forward.1} parent=1 // pred_check
      _
    $region11: #{forward.1} parent=1 // pred_check_branch
      %21 = sbr.rel (0) target = $region13
    $region12: #{forward.1} parent=1 // pred_region
      _
    $region13: #{forward.1} parent=1 // pred_fallthru
      _
    // Predicated region
    $region14: #{forward.1} parent=1 // pred_check
      _
    $region15: #{forward.1} parent=1 // pred_check_branch
      %23 = sbr.rel (0) target = $region17
    $region16: #{forward.1} parent=1 // pred_region
      %s25 = ssub.s32 1024, 1024
      %26 = vsyncadd [#allocation3], %s25
      %s27 = sshll.u32 [#allocation2], 4
      %s28 = int_to_ptr.vmem [resolvable:$true] %s27
      %33 = dma.hbm_to_vmem [thread:$0]  %s3, 1024, %s28, [#allocation3], 64, 64, 4
    $region17: #{forward.1} parent=1 // pred_fallthru
      _
    // Predicated region
    $region18: #{forward.1} parent=1 // pred_check
      _
    $region19: #{forward.1} parent=1 // pred_check_branch
      %35 = sbr.rel (0) target = $region21
    $region20: #{forward.1} parent=1 // pred_region
      _
    $region21: #{forward.1} parent=1 // pred_fallthru
      _
    // Predicated region
    $region22: #{forward.1} parent=1 // pred_check
      _
    $region23: #{forward.1} parent=1 // pred_check_branch
      %37 = sbr.rel (0) target = $region25
    $region24: #{forward.1} parent=1 // pred_region
      %s39 = ssub.s32 1024, 1024
      %40 = vsyncadd [#allocation5], %s39
      %s41 = sshll.u32 [#allocation4], 4
      %s42 = int_to_ptr.vmem [resolvable:$true] %s41
      %47 = dma.hbm_to_vmem [thread:$0]  %s5, 1024, %s42, [#allocation5], 64, 64, 4
    $region25: #{forward.1} parent=1 // pred_fallthru
      _
    // Predicated region
    $region26: #{forward.1} parent=1 // pred_check
      _
    $region27: #{forward.1} parent=1 // pred_check_branch
      %49 = sbr.rel (0) target = $region29
    $region28: #{forward.1} parent=1 // pred_region
      _
    $region29: #{forward.1} parent=1 // pred_fallthru
      _
    // Predicated region
    $region30: #{forward.1} parent=1 // pred_check
      _
    $region31: #{forward.1} parent=1 // pred_check_branch
      %51 = sbr.rel (0) target = $region33
    $region32: #{forward.1} parent=1 // pred_region
      %s53 = ssub.s32 1024, 1024
      %54 = vsyncadd [#allocation5], %s53
      %s55 = sshll.u32 [#allocation6], 4
      %s56 = int_to_ptr.vmem [resolvable:$true] %s55
      %61 = dma.hbm_to_vmem [thread:$0]  %s7, 1024, %s56, [#allocation5], 64, 64, 4
    $region33: #{forward.1} parent=1 // pred_fallthru
      _
    // Predicated region
    $region34: #{forward.1} parent=1 // pred_check
      _
    $region35: #{forward.1} parent=1 // pred_check_branch
      %63 = sbr.rel (0) target = $region37
    $region36: #{forward.1} parent=1 // pred_region
      _
    $region37: #{forward.1} parent=1 // pred_fallthru
      _
    // Predicated region
    $region38: #{forward.1} parent=1 // pred_check
      _
    $region39: #{forward.1} parent=1 // pred_check_branch
      %65 = sbr.rel (0) target = $region41
    $region40: #{forward.1} parent=1 // pred_region
      %66 = dma.done [#allocation3], 1024
    $region41: #{forward.1} parent=1 // pred_fallthru
      _
    // Predicated region
    $region42: #{forward.1} parent=1 // pred_check
      _
    $region43: #{forward.1} parent=1 // pred_check_branch
      %68 = sbr.rel (0) target = $region45
    $region44: #{forward.1} parent=1 // pred_region
      %69 = dma.done [#allocation5], 1024
    $region45: #{forward.1} parent=1 // pred_fallthru
      _
    // Predicated region
    $region46: #{forward.1} parent=1 // pred_check
      _
    $region47: #{forward.1} parent=1 // pred_check_branch
      %71 = sbr.rel (0) target = $region49
    $region48: #{forward.1} parent=1 // pred_region
      %72 = dma.done [#allocation5], 1024
    $region49: #{forward.1} parent=1 // pred_fallthru
      _
    %v74 = vld [vmem:[%s0] sm:$0xf]
    %v75 = vld [vmem:[%s0 + $0x4] sm:$0xf]
    %v76 = vld [vmem:[%s1] sm:$0xf]
    %v77 = vld [vmem:[%s1 + $0x4] sm:$0xf]
    %v78 = vld [vmem:[%s1 + $0x8] sm:$0xf]
    %v79 = vld [vmem:[%s1 + $0xc] sm:$0xf]
    %v80 = vld [vmem:[%s2] sm:$0x1]
    %v82 = vlaneseq
    %v83 = vshrl.u32 %v82, 7
    %v84 = vsub.s32 0, %v83
    %v85 = vrot.slane %v80, %v84
    %v89 = vunpack.c.l.b16 %v74
    %v90 = vunpack.c.l.b16 %v75
    %v91 = vpack.c.b16 %v90, %v89
    %v96 = vunpack.c.l.b16 %v76
    %v97 = vunpack.c.l.b16 %v77
    %v98 = vunpack.c.l.b16 %v78
    %v99 = vunpack.c.l.b16 %v79
    %v100 = vpack.c.b16 %v97, %v96
    %v101 = vpack.c.b16 %v99, %v98
    %vm104 = vcmask 261120
    %v106 = vsel %vm104, %v91, 0
    %108 = vmatprep.subr.bf16.mxu0 0
    %109 = vmatpush1.bf16.msra.mxu0 0
    %110 = vmatprep.subr.bf16.mxu0 0
    %111 = vmatpush1.bf16.msra.mxu0 0
    %112 = vmatprep.subr.bf16.mxu0 0
    %113 = vmatpush1.bf16.msra.mxu0 0
    %114 = vmatprep.subr.bf16.mxu0 0
    %115 = vmatpush1.bf16.msra.mxu0 0
    %116 = vmatprep.subr.bf16.mxu0 0
    %117 = vmatpush1.bf16.msra.mxu0 0
    %118 = vmatprep.subr.bf16.mxu0 0
    %119 = vmatpush1.bf16.msra.mxu0 0
    %120 = vmatprep.subr.bf16.mxu0 0
    %121 = vmatpush1.bf16.msra.mxu0 %v101
    %122 = vmatprep.subr.bf16.mxu0 0
    %123 = vmatpush1.bf16.msra.mxu0 %v100
    %124 = vmatprep.subr.bf16.mxu0 0
    %125 = vmatpush2.bf16.msra.mxu0 0
    %126 = vmatprep.subr.bf16.mxu0 0
    %127 = vmatpush2.bf16.msra.mxu0 0
    %128 = vmatprep.subr.bf16.mxu0 0
    %129 = vmatpush2.bf16.msra.mxu0 0
    %130 = vmatprep.subr.bf16.mxu0 0
    %131 = vmatpush2.bf16.msra.mxu0 0
    %132 = vmatprep.subr.bf16.mxu0 0
    %133 = vmatpush2.bf16.msra.mxu0 0
    %134 = vmatprep.subr.bf16.mxu0 0
    %135 = vmatpush2.bf16.msra.mxu0 0
    %136 = vmatprep.subr.bf16.mxu0 0
    %137 = vmatpush2.bf16.msra.mxu0 0
    %138 = vmatprep.subr.bf16.mxu0 0
    %139 = vmatpush2.bf16.msra.mxu0 0
    %140 = vmatprep.mubr.bf16.mxu0 0
    %141 = vmatmul.mubr.bf16.gmra.mxu0 %v106
    %v142 = vpop.f32.mrf.mxu0
    %v143 = vadd.f32 %v85, %v142
    %v144 = vpop.f32.mrf.mxu0
    %v145 = vpop.f32.mrf.mxu0
    %v146 = vadd.f32 %v85, %v145
    %v147 = vpop.f32.mrf.mxu0
    %148 = vdwg.mxu0
    %v149 = vtanh.pop %v143
    %v150 = vtanh.pop %v146
    %v151 = vpack.c.bf16 %v150, %v149
    %v152 = vld [vmem:[#allocation2] sm:$0xf]
    %v153 = vld [vmem:[#allocation2 + $0x4] sm:$0xf]
    %v154 = vld [vmem:[#allocation2 + $0x8] sm:$0xf]
    %v155 = vld [vmem:[#allocation2 + $0xc] sm:$0xf]
    %v156 = vld [vmem:[#allocation2 + $0x10] sm:$0xf]
    %v157 = vld [vmem:[#allocation2 + $0x14] sm:$0xf]
    %v158 = vld [vmem:[#allocation2 + $0x18] sm:$0xf]
    %v159 = vld [vmem:[#allocation2 + $0x1c] sm:$0xf]
    %v160 = vld [vmem:[#allocation2 + $0x20] sm:$0xf]
    %v161 = vld [vmem:[#allocation2 + $0x24] sm:$0xf]
    %v162 = vld [vmem:[#allocation2 + $0x28] sm:$0xf]
    %v163 = vld [vmem:[#allocation2 + $0x2c] sm:$0xf]
    %v164 = vld [vmem:[#allocation2 + $0x30] sm:$0xf]
    %v165 = vld [vmem:[#allocation2 + $0x34] sm:$0xf]
    %v166 = vld [vmem:[#allocation2 + $0x38] sm:$0xf]
    %v167 = vld [vmem:[#allocation2 + $0x3c] sm:$0xf]
    %v168 = vld [vmem:[%s4] sm:$0x1]
    %v170 = vlaneseq
    %v171 = vshrl.u32 %v170, 7
    %v172 = vsub.s32 0, %v171
    %v173 = vrot.slane %v168, %v172
    %v191 = vunpack.c.l.b16 %v152
    %v192 = vunpack.c.l.b16 %v153
    %v193 = vunpack.c.l.b16 %v154
    %v194 = vunpack.c.l.b16 %v155
    %v195 = vunpack.c.l.b16 %v156
    %v196 = vunpack.c.l.b16 %v157
    %v197 = vunpack.c.l.b16 %v158
    %v198 = vunpack.c.l.b16 %v159
    %v199 = vunpack.c.l.b16 %v160
    %v200 = vunpack.c.l.b16 %v161
    %v201 = vunpack.c.l.b16 %v162
    %v202 = vunpack.c.l.b16 %v163
    %v203 = vunpack.c.l.b16 %v164
    %v204 = vunpack.c.l.b16 %v165
    %v205 = vunpack.c.l.b16 %v166
    %v206 = vunpack.c.l.b16 %v167
    %v207 = vpack.c.b16 %v192, %v191
    %v208 = vpack.c.b16 %v194, %v193
    %v209 = vpack.c.b16 %v196, %v195
    %v210 = vpack.c.b16 %v198, %v197
    %v211 = vpack.c.b16 %v200, %v199
    %v212 = vpack.c.b16 %v202, %v201
    %v213 = vpack.c.b16 %v204, %v203
    %v214 = vpack.c.b16 %v206, %v205
    %223 = vmatprep.subr.bf16.mxu0 0
    %224 = vmatpush1.bf16.msra.mxu0 %v214
    %225 = vmatprep.subr.bf16.mxu0 0
    %226 = vmatpush1.bf16.msra.mxu0 %v213
    %227 = vmatprep.subr.bf16.mxu0 0
    %228 = vmatpush1.bf16.msra.mxu0 %v212
    %229 = vmatprep.subr.bf16.mxu0 0
    %230 = vmatpush1.bf16.msra.mxu0 %v211
    %231 = vmatprep.subr.bf16.mxu0 0
    %232 = vmatpush1.bf16.msra.mxu0 %v210
    %233 = vmatprep.subr.bf16.mxu0 0
    %234 = vmatpush1.bf16.msra.mxu0 %v209
    %235 = vmatprep.subr.bf16.mxu0 0
    %236 = vmatpush1.bf16.msra.mxu0 %v208
    %237 = vmatprep.subr.bf16.mxu0 0
    %238 = vmatpush1.bf16.msra.mxu0 %v207
    %239 = vmatprep.subr.bf16.mxu0 0
    %240 = vmatpush2.bf16.msra.mxu0 0
    %241 = vmatprep.subr.bf16.mxu0 0
    %242 = vmatpush2.bf16.msra.mxu0 0
    %243 = vmatprep.subr.bf16.mxu0 0
    %244 = vmatpush2.bf16.msra.mxu0 0
    %245 = vmatprep.subr.bf16.mxu0 0
    %246 = vmatpush2.bf16.msra.mxu0 0
    %247 = vmatprep.subr.bf16.mxu0 0
    %248 = vmatpush2.bf16.msra.mxu0 0
    %249 = vmatprep.subr.bf16.mxu0 0
    %250 = vmatpush2.bf16.msra.mxu0 0
    %251 = vmatprep.subr.bf16.mxu0 0
    %252 = vmatpush2.bf16.msra.mxu0 0
    %253 = vmatprep.subr.bf16.mxu0 0
    %254 = vmatpush2.bf16.msra.mxu0 0
    %255 = vmatprep.mubr.bf16.mxu0 0
    %256 = vmatmul.mubr.bf16.gmra.mxu0 %v151
    %v257 = vpop.f32.mrf.mxu0
    %v258 = vadd.f32 %v173, %v257
    %v259 = vpop.f32.mrf.mxu0
    %v260 = vpop.f32.mrf.mxu0
    %v261 = vadd.f32 %v173, %v260
    %v262 = vpop.f32.mrf.mxu0
    %263 = vdwg.mxu0
    %264 = vadd.xlane.f32.xlu0 %v258
    %v265 = vpop.xlane.xlu0 %264
    %266 = vadd.xlane.f32.xlu0 %v261
    %v267 = vpop.xlane.xlu0 %266
    %v268 = vmul.f32 %v265, 0.015625
    %v269 = vmul.f32 %v267, 0.015625
    %v270 = vlaneseq
    %v271 = vand.u32 %v270, 127
    %vm272 = vcmp.lt.s32.totalorder %v271, 64
    %v273 = vsub.f32 %v258, %v268
    %v274 = vsub.f32 %v261, %v269
    %v275 = vsel %vm272, %v273, 0.0
    %v276 = vsel %vm272, %v274, 0.0
    %v277 = vmul.f32 %v275, %v275
    %v278 = vmul.f32 %v276, %v276
    %279 = vadd.xlane.f32.xlu0 %v277
    %v280 = vpop.xlane.xlu0 %279
    %281 = vadd.xlane.f32.xlu0 %v278
    %v282 = vpop.xlane.xlu0 %281
    %v283 = vmul.f32 %v280, 0.015625
    %v284 = vmul.f32 %v282, 0.015625
    %v285 = vadd.f32 %v283, 1e-05
    %v286 = vadd.f32 %v284, 1e-05
    %v287 = vrsqrt.pop %v285
    %v288 = vrsqrt.pop %v286
    %v289 = vmul.f32 %v275, %v287
    %v290 = vmul.f32 %v276, %v288
    %v291 = vpack.c.bf16 %v290, %v289
    %v292 = vld [vmem:[#allocation4] sm:$0xf]
    %v293 = vld [vmem:[#allocation4 + $0x4] sm:$0xf]
    %v294 = vld [vmem:[#allocation4 + $0x8] sm:$0xf]
    %v295 = vld [vmem:[#allocation4 + $0xc] sm:$0xf]
    %v296 = vld [vmem:[#allocation4 + $0x10] sm:$0xf]
    %v297 = vld [vmem:[#allocation4 + $0x14] sm:$0xf]
    %v298 = vld [vmem:[#allocation4 + $0x18] sm:$0xf]
    %v299 = vld [vmem:[#allocation4 + $0x1c] sm:$0xf]
    %v300 = vld [vmem:[#allocation4 + $0x20] sm:$0xf]
    %v301 = vld [vmem:[#allocation4 + $0x24] sm:$0xf]
    %v302 = vld [vmem:[#allocation4 + $0x28] sm:$0xf]
    %v303 = vld [vmem:[#allocation4 + $0x2c] sm:$0xf]
    %v304 = vld [vmem:[#allocation4 + $0x30] sm:$0xf]
    %v305 = vld [vmem:[#allocation4 + $0x34] sm:$0xf]
    %v306 = vld [vmem:[#allocation4 + $0x38] sm:$0xf]
    %v307 = vld [vmem:[#allocation4 + $0x3c] sm:$0xf]
    %v308 = vld [vmem:[%s6] sm:$0x1]
    %v310 = vlaneseq
    %v311 = vshrl.u32 %v310, 7
    %v312 = vsub.s32 0, %v311
    %v313 = vrot.slane %v308, %v312
    %v331 = vunpack.c.l.b16 %v292
    %v332 = vunpack.c.l.b16 %v293
    %v333 = vunpack.c.l.b16 %v294
    %v334 = vunpack.c.l.b16 %v295
    %v335 = vunpack.c.l.b16 %v296
    %v336 = vunpack.c.l.b16 %v297
    %v337 = vunpack.c.l.b16 %v298
    %v338 = vunpack.c.l.b16 %v299
    %v339 = vunpack.c.l.b16 %v300
    %v340 = vunpack.c.l.b16 %v301
    %v341 = vunpack.c.l.b16 %v302
    %v342 = vunpack.c.l.b16 %v303
    %v343 = vunpack.c.l.b16 %v304
    %v344 = vunpack.c.l.b16 %v305
    %v345 = vunpack.c.l.b16 %v306
    %v346 = vunpack.c.l.b16 %v307
    %v347 = vpack.c.b16 %v332, %v331
    %v348 = vpack.c.b16 %v334, %v333
    %v349 = vpack.c.b16 %v336, %v335
    %v350 = vpack.c.b16 %v338, %v337
    %v351 = vpack.c.b16 %v340, %v339
    %v352 = vpack.c.b16 %v342, %v341
    %v353 = vpack.c.b16 %v344, %v343
    %v354 = vpack.c.b16 %v346, %v345
    %363 = vmatprep.subr.bf16.mxu0 0
    %364 = vmatpush1.bf16.msra.mxu0 %v354
    %365 = vmatprep.subr.bf16.mxu0 0
    %366 = vmatpush1.bf16.msra.mxu0 %v353
    %367 = vmatprep.subr.bf16.mxu0 0
    %368 = vmatpush1.bf16.msra.mxu0 %v352
    %369 = vmatprep.subr.bf16.mxu0 0
    %370 = vmatpush1.bf16.msra.mxu0 %v351
    %371 = vmatprep.subr.bf16.mxu0 0
    %372 = vmatpush1.bf16.msra.mxu0 %v350
    %373 = vmatprep.subr.bf16.mxu0 0
    %374 = vmatpush1.bf16.msra.mxu0 %v349
    %375 = vmatprep.subr.bf16.mxu0 0
    %376 = vmatpush1.bf16.msra.mxu0 %v348
    %377 = vmatprep.subr.bf16.mxu0 0
    %378 = vmatpush1.bf16.msra.mxu0 %v347
    %379 = vmatprep.subr.bf16.mxu0 0
    %380 = vmatpush2.bf16.msra.mxu0 0
    %381 = vmatprep.subr.bf16.mxu0 0
    %382 = vmatpush2.bf16.msra.mxu0 0
    %383 = vmatprep.subr.bf16.mxu0 0
    %384 = vmatpush2.bf16.msra.mxu0 0
    %385 = vmatprep.subr.bf16.mxu0 0
    %386 = vmatpush2.bf16.msra.mxu0 0
    %387 = vmatprep.subr.bf16.mxu0 0
    %388 = vmatpush2.bf16.msra.mxu0 0
    %389 = vmatprep.subr.bf16.mxu0 0
    %390 = vmatpush2.bf16.msra.mxu0 0
    %391 = vmatprep.subr.bf16.mxu0 0
    %392 = vmatpush2.bf16.msra.mxu0 0
    %393 = vmatprep.subr.bf16.mxu0 0
    %394 = vmatpush2.bf16.msra.mxu0 0
    %395 = vmatprep.mubr.bf16.mxu0 0
    %396 = vmatmul.mubr.bf16.gmra.mxu0 %v291
    %v397 = vpop.f32.mrf.mxu0
    %v398 = vadd.f32 %v313, %v397
    %v399 = vpop.f32.mrf.mxu0
    %v400 = vpop.f32.mrf.mxu0
    %v401 = vadd.f32 %v313, %v400
    %v402 = vpop.f32.mrf.mxu0
    %403 = vdwg.mxu0
    %404 = vadd.xlane.f32.xlu0 %v398
    %v405 = vpop.xlane.xlu0 %404
    %406 = vadd.xlane.f32.xlu0 %v401
    %v407 = vpop.xlane.xlu0 %406
    %v408 = vmul.f32 %v405, 0.015625
    %v409 = vmul.f32 %v407, 0.015625
    %v410 = vsub.f32 %v398, %v408
    %v411 = vsub.f32 %v401, %v409
    %v412 = vsel %vm272, %v410, 0.0
    %v413 = vsel %vm272, %v411, 0.0
    %v414 = vmul.f32 %v412, %v412
    %v415 = vmul.f32 %v413, %v413
    %416 = vadd.xlane.f32.xlu0 %v414
    %v417 = vpop.xlane.xlu0 %416
    %418 = vadd.xlane.f32.xlu0 %v415
    %v419 = vpop.xlane.xlu0 %418
    %v420 = vmul.f32 %v417, 0.015625
    %v421 = vmul.f32 %v419, 0.015625
    %v422 = vadd.f32 %v420, 1e-05
    %v423 = vadd.f32 %v421, 1e-05
    %v424 = vrsqrt.pop %v422
    %v425 = vrsqrt.pop %v423
    %v426 = vmul.f32 %v412, %v424
    %v427 = vmul.f32 %v413, %v425
    %v428 = vpack.c.bf16 %v427, %v426
    %v429 = vld [vmem:[#allocation6] sm:$0xf]
    %v430 = vld [vmem:[#allocation6 + $0x4] sm:$0xf]
    %v431 = vld [vmem:[#allocation6 + $0x8] sm:$0xf]
    %v432 = vld [vmem:[#allocation6 + $0xc] sm:$0xf]
    %v433 = vld [vmem:[#allocation6 + $0x10] sm:$0xf]
    %v434 = vld [vmem:[#allocation6 + $0x14] sm:$0xf]
    %v435 = vld [vmem:[#allocation6 + $0x18] sm:$0xf]
    %v436 = vld [vmem:[#allocation6 + $0x1c] sm:$0xf]
    %v437 = vld [vmem:[#allocation6 + $0x20] sm:$0xf]
    %v438 = vld [vmem:[#allocation6 + $0x24] sm:$0xf]
    %v439 = vld [vmem:[#allocation6 + $0x28] sm:$0xf]
    %v440 = vld [vmem:[#allocation6 + $0x2c] sm:$0xf]
    %v441 = vld [vmem:[#allocation6 + $0x30] sm:$0xf]
    %v442 = vld [vmem:[#allocation6 + $0x34] sm:$0xf]
    %v443 = vld [vmem:[#allocation6 + $0x38] sm:$0xf]
    %v444 = vld [vmem:[#allocation6 + $0x3c] sm:$0xf]
    %v445 = vld [vmem:[%s8] sm:$0x1]
    %v447 = vlaneseq
    %v448 = vshrl.u32 %v447, 7
    %v449 = vsub.s32 0, %v448
    %v450 = vrot.slane %v445, %v449
    %v468 = vunpack.c.l.b16 %v429
    %v469 = vunpack.c.l.b16 %v430
    %v470 = vunpack.c.l.b16 %v431
    %v471 = vunpack.c.l.b16 %v432
    %v472 = vunpack.c.l.b16 %v433
    %v473 = vunpack.c.l.b16 %v434
    %v474 = vunpack.c.l.b16 %v435
    %v475 = vunpack.c.l.b16 %v436
    %v476 = vunpack.c.l.b16 %v437
    %v477 = vunpack.c.l.b16 %v438
    %v478 = vunpack.c.l.b16 %v439
    %v479 = vunpack.c.l.b16 %v440
    %v480 = vunpack.c.l.b16 %v441
    %v481 = vunpack.c.l.b16 %v442
    %v482 = vunpack.c.l.b16 %v443
    %v483 = vunpack.c.l.b16 %v444
    %v484 = vpack.c.b16 %v469, %v468
    %v485 = vpack.c.b16 %v471, %v470
    %v486 = vpack.c.b16 %v473, %v472
    %v487 = vpack.c.b16 %v475, %v474
    %v488 = vpack.c.b16 %v477, %v476
    %v489 = vpack.c.b16 %v479, %v478
    %v490 = vpack.c.b16 %v481, %v480
    %v491 = vpack.c.b16 %v483, %v482
    %500 = vmatprep.subr.bf16.mxu0 0
    %501 = vmatpush1.bf16.msra.mxu0 %v491
    %502 = vmatprep.subr.bf16.mxu0 0
    %503 = vmatpush1.bf16.msra.mxu0 %v490
    %504 = vmatprep.subr.bf16.mxu0 0
    %505 = vmatpush1.bf16.msra.mxu0 %v489
    %506 = vmatprep.subr.bf16.mxu0 0
    %507 = vmatpush1.bf16.msra.mxu0 %v488
    %508 = vmatprep.subr.bf16.mxu0 0
    %509 = vmatpush1.bf16.msra.mxu0 %v487
    %510 = vmatprep.subr.bf16.mxu0 0
    %511 = vmatpush1.bf16.msra.mxu0 %v486
    %512 = vmatprep.subr.bf16.mxu0 0
    %513 = vmatpush1.bf16.msra.mxu0 %v485
    %514 = vmatprep.subr.bf16.mxu0 0
    %515 = vmatpush1.bf16.msra.mxu0 %v484
    %516 = vmatprep.subr.bf16.mxu0 0
    %517 = vmatpush2.bf16.msra.mxu0 0
    %518 = vmatprep.subr.bf16.mxu0 0
    %519 = vmatpush2.bf16.msra.mxu0 0
    %520 = vmatprep.subr.bf16.mxu0 0
    %521 = vmatpush2.bf16.msra.mxu0 0
    %522 = vmatprep.subr.bf16.mxu0 0
    %523 = vmatpush2.bf16.msra.mxu0 0
    %524 = vmatprep.subr.bf16.mxu0 0
    %525 = vmatpush2.bf16.msra.mxu0 0
    %526 = vmatprep.subr.bf16.mxu0 0
    %527 = vmatpush2.bf16.msra.mxu0 0
    %528 = vmatprep.subr.bf16.mxu0 0
    %529 = vmatpush2.bf16.msra.mxu0 0
    %530 = vmatprep.subr.bf16.mxu0 0
    %531 = vmatpush2.bf16.msra.mxu0 0
    %532 = vmatprep.mubr.bf16.mxu0 0
    %533 = vmatmul.mubr.bf16.gmra.mxu0 %v428
    %v534 = vpop.f32.mrf.mxu0
    %v535 = vadd.f32 %v450, %v534
    %v536 = vpop.f32.mrf.mxu0
    %v537 = vpop.f32.mrf.mxu0
    %v538 = vadd.f32 %v450, %v537
    %v539 = vpop.f32.mrf.mxu0
    %540 = vdwg.mxu0
    %v541 = vpack.c.bf16 %v538, %v535
    %v543 = vunpack.c.l.b16 %v541
    %v544 = vunpack.c.h.b16 %v541
    %v545 = vpack.c.b16 %v543, %v543
    %v546 = vpack.c.b16 %v544, %v544
    %549 = vst [vmem:[%s9] sm:$0xf] %v545
    %550 = vst [vmem:[%s9 + $0x4] sm:$0xf] %v546
    // Predicated region
    $region50: #{forward.1} parent=1 // pred_check
      _
    $region51: #{forward.1} parent=1 // pred_check_branch
      %552 = sbr.rel (0) target = $region53
    $region52: #{forward.1} parent=1 // pred_region
      _
    $region53: #{forward.1} parent=1 // pred_fallthru
      _
    // Predicated region
    $region54: #{forward.1} parent=1 // pred_check
      _
    $region55: #{forward.1} parent=1 // pred_check_branch
      %554 = sbr.rel (0) target = $region57
    $region56: #{forward.1} parent=1 // pred_region
      _
    $region57: #{forward.1} parent=1 // pred_fallthru
      _
    %555 = vsyncpa [#allocation3], 1
    %556 = vsyncpa [#allocation5], 1

</llo_original>
